<compile_context>
chip_gen: v5e
topology: v5e:2x2
jax: 0.10.0
libtpu: 0.0.40
codegen_flags: <defaults>
</compile_context>

<pallas_src>
import functools

import numpy as np
import jax
import jax.numpy as jnp
from jax.experimental import pallas as pl
from jax.experimental.pallas import tpu as pltpu

BN_EPS = 1e-5
_LANE = 128
_SUBLANE = 8


def _cdiv(a, b):
    return -(-a // b)


def _round_up(x, m):
    return _cdiv(x, m) * m


def _pick_block_rows(n_rows, dims, act_bytes, *, target_rows=512, vmem_budget=32 << 20):
    """Batch-tile size: big enough to sit near the HBM roofline (>=512 rows when the
    batch allows), capped by a VMEM budget that is safe for v5e's 16 MiB default and
    v7x's 64 MiB physical VMEM, and split evenly so padding waste is <= 7 rows/tile."""
    bp8 = _round_up(max(n_rows, 1), _SUBLANE)
    max_io = max(dims[i] + dims[i + 1] for i in range(len(dims) - 1))
    max_w = max(dims[i] * dims[i + 1] for i in range(len(dims) - 1))
    spare = max(vmem_budget - max_w * act_bytes, 1 << 20)
    # 2x double-buffering of in+out tiles, 4 B/elem worst case (f32 outputs).
    rows_cap = max(_SUBLANE, (spare // (2 * max_io * 4)) // _SUBLANE * _SUBLANE)
    target = max(_SUBLANE, min(target_rows, rows_cap))
    n_tiles = _cdiv(bp8, target)
    block_rows = _round_up(_cdiv(bp8, n_tiles), _SUBLANE)
    return block_rows, n_tiles


# --------------------------------------------------------------------------------------
# Per-layer stage kernel (batch_norm=True path).
# --------------------------------------------------------------------------------------
def _make_stage_kernel(apply_in_act, emit_stats, block_rows, n_valid_rows):
    """One Linear stage: z = act(x) @ W + b for one batch tile, where
    act(x) = relu(x*scale + shift) when `apply_in_act` (folded BN/ReLU of the previous
    layer), identity otherwise.  When `emit_stats`, the tile's masked per-feature sum
    and sum-of-squares of z are written to rows 0/1 of its (8, d_out) stats slab."""

    def kernel(*refs):
        it = iter(refs)
        x_ref = next(it)
        if apply_in_act:
            scale_ref = next(it)
            shift_ref = next(it)
        w_ref = next(it)
        b_ref = next(it)
        z_ref = next(it)
        stats_ref = next(it) if emit_stats else None

        x = x_ref[...]
        if apply_in_act:
            # Folded BatchNorm (single f32 FMA) + ReLU, then back to bf16 for the MXU.
            a = jnp.maximum(x.astype(jnp.float32) * scale_ref[...] + shift_ref[...], 0.0)
            x = a.astype(x_ref.dtype)

        z = jnp.dot(x, w_ref[...], preferred_element_type=jnp.float32) + b_ref[...]
        z_ref[...] = z.astype(z_ref.dtype)

        if emit_stats:
            # In-kernel padding mask (no mask DMA); z is the f32 accumulator, so the
            # one-pass statistics are accumulated fully in f32.
            row0 = pl.program_id(0) * block_rows
            rows = jax.lax.broadcasted_iota(jnp.int32, (block_rows, 1), 0) + row0
            mask = (rows < n_valid_rows).astype(jnp.float32)
            zm = z * mask
            zsum = jnp.sum(zm, axis=0, keepdims=True)
            zssq = jnp.sum(zm * z, axis=0, keepdims=True)
            ridx = jax.lax.broadcasted_iota(jnp.int32, stats_ref.shape, 0)
            stats_ref[...] = jnp.where(ridx == 0, zsum,
                                       jnp.where(ridx == 1, zssq, 0.0))

    return kernel


def _run_stage(h, scale, shift, w, b, *, emit_stats, block_rows, n_tiles,
               n_valid_rows, out_dtype):
    bp, d_in = h.shape
    d_out = w.shape[1]
    apply_in_act = scale is not None
    act_bytes = jnp.dtype(h.dtype).itemsize
    out_bytes = jnp.dtype(out_dtype).itemsize

    in_specs = [pl.BlockSpec((block_rows, d_in), lambda i: (i, 0))]
    inputs = [h]
    if apply_in_act:
        in_specs += [pl.BlockSpec((1, d_in), lambda i: (0, 0)),
                     pl.BlockSpec((1, d_in), lambda i: (0, 0))]
        inputs += [scale, shift]
    in_specs += [pl.BlockSpec((d_in, d_out), lambda i: (0, 0)),
                 pl.BlockSpec((1, d_out), lambda i: (0, 0))]
    inputs += [w, b]

    out_shape = [jax.ShapeDtypeStruct((bp, d_out), out_dtype)]
    out_specs = [pl.BlockSpec((block_rows, d_out), lambda i: (i, 0))]
    if emit_stats:
        # Per-tile partial statistics -> no cross-tile accumulator, batch axis stays
        # "parallel" (v7x megacore sharding); reduced in the wrapper.
        out_shape.append(jax.ShapeDtypeStruct((n_tiles * _SUBLANE, d_out), jnp.float32))
        out_specs.append(pl.BlockSpec((_SUBLANE, d_out), lambda i: (i, 0)))

    need = (2 * block_rows * d_in * act_bytes          # double-buffered input tiles
            + 2 * block_rows * d_out * out_bytes       # double-buffered output tiles
            + d_in * d_out * act_bytes                 # resident weights
            + 16 * d_out * 4)                          # bias/scale/shift/stats slabs
    vmem_limit = int(min(max(2 * need + (1 << 20), 8 << 20), 56 << 20))

    return pl.pallas_call(
        _make_stage_kernel(apply_in_act, emit_stats, block_rows, n_valid_rows),
        grid=(n_tiles,),
        in_specs=in_specs,
        out_specs=tuple(out_specs),
        out_shape=tuple(out_shape),
        compiler_params=pltpu.CompilerParams(
            dimension_semantics=("parallel",),
            vmem_limit_bytes=vmem_limit),
    )(*inputs)


# --------------------------------------------------------------------------------------
# Fully fused tower kernel (batch_norm=False path: no whole-batch barrier).
# --------------------------------------------------------------------------------------
def _make_fused_kernel(num_layers):
    def kernel(*refs):
        x_ref = refs[0]
        out_ref = refs[-1]
        h = x_ref[...]
        z = None
        for i in range(num_layers):
            w = refs[1 + 2 * i][...]
            b = refs[2 + 2 * i][...]
            z = jnp.dot(h, w, preferred_element_type=jnp.float32) + b
            if i < num_layers - 1:
                h = jnp.maximum(z, 0.0).astype(x_ref.dtype)
        out_ref[...] = z.astype(out_ref.dtype)

    return kernel


def _run_fused_tower(h, ws, bs, *, block_rows, n_tiles, out_dtype):
    bp, d0 = h.shape
    num_layers = len(ws)
    d_last = ws[-1].shape[1]
    act_bytes = jnp.dtype(h.dtype).itemsize

    in_specs = [pl.BlockSpec((block_rows, d0), lambda i: (i, 0))]
    inputs = [h]
    for w, b in zip(ws, bs):
        di, do = w.shape
        in_specs += [pl.BlockSpec((di, do), lambda i: (0, 0)),
                     pl.BlockSpec((1, do), lambda i: (0, 0))]
        inputs += [w, b]

    dims = [d0] + [w.shape[1] for w in ws]
    need = (2 * block_rows * d0 * act_bytes
            + 2 * block_rows * d_last * jnp.dtype(out_dtype).itemsize
            + sum(int(w.size) for w in ws) * act_bytes
            + block_rows * sum(dims[1:]) * 4)          # live hidden activations (f32/bf16)
    vmem_limit = int(min(max(2 * need + (1 << 20), 8 << 20), 56 << 20))

    return pl.pallas_call(
        _make_fused_kernel(num_layers),
        grid=(n_tiles,),
        in_specs=in_specs,
        out_specs=pl.BlockSpec((block_rows, d_last), lambda i: (i, 0)),
        out_shape=jax.ShapeDtypeStruct((bp, d_last), out_dtype),
        compiler_params=pltpu.CompilerParams(
            dimension_semantics=("parallel",),
            vmem_limit_bytes=vmem_limit),
    )(*inputs)


# --------------------------------------------------------------------------------------
# Wrapper.
# --------------------------------------------------------------------------------------
def mlp_forward(params, x, *, batch_norm=True, target_block_rows=512,
                act_dtype=jnp.bfloat16):
    """Forward pass of MultiLayerPerceptron (training-mode BatchNorm statistics)."""
    n_rows, d_in0 = x.shape
    ws, bs = params["W"], params["b"]
    gammas, betas = params["gamma"], params["beta"]
    num_layers = len(ws)
    dims = [d_in0] + [w.shape[1] for w in ws]
    d_final = dims[-1]
    act_bytes = jnp.dtype(act_dtype).itemsize

    block_rows, n_tiles = _pick_block_rows(n_rows, dims, act_bytes,
                                           target_rows=target_block_rows)
    bp = block_rows * n_tiles
    h = jnp.pad(x.astype(act_dtype), ((0, bp - n_rows), (0, 0)))

    # Lane-pad the (BN-free) final layer to a 128 multiple so its output stores are
    # full-lane vst; zero weight/bias columns are exact and sliced back off below.
    d_final_pad = _round_up(d_final, _LANE)
    w_last = jnp.pad(ws[-1].astype(act_dtype), ((0, 0), (0, d_final_pad - d_final)))
    b_last = jnp.pad(bs[-1].astype(jnp.float32), ((0, 0), (0, d_final_pad - d_final)))

    if not batch_norm:
        # No whole-batch barrier -> one fused pallas_call over batch tiles; the hidden
        # activations never round-trip through HBM.
        ws_k = [w.astype(act_dtype) for w in ws[:-1]] + [w_last]
        bs_k = [b.astype(jnp.float32) for b in bs[:-1]] + [b_last]
        out = _run_fused_tower(h, ws_k, bs_k, block_rows=block_rows,
                               n_tiles=n_tiles, out_dtype=jnp.float32)
        return out[:n_rows, :d_final]

    scale = shift = None
    for i in range(num_layers):
        last = i == num_layers - 1
        w = w_last if last else ws[i].astype(act_dtype)
        b = b_last if last else bs[i].astype(jnp.float32)
        outs = _run_stage(h, scale, shift, w, b,
                          emit_stats=not last,
                          block_rows=block_rows, n_tiles=n_tiles,
                          n_valid_rows=n_rows,
                          out_dtype=jnp.float32 if last else act_dtype)
        if last:
            return outs[0][:n_rows, :d_final]

        h, stats = outs
        stats = stats.reshape(n_tiles, _SUBLANE, dims[i + 1])
        z_sum = jnp.sum(stats[:, 0, :], axis=0, keepdims=True)
        z_ssq = jnp.sum(stats[:, 1, :], axis=0, keepdims=True)
        inv_n = 1.0 / float(n_rows)
        mean = z_sum * inv_n
        var = jnp.maximum(z_ssq * inv_n - mean * mean, 0.0)   # biased var (train-mode BN)
        scale = gammas[i] * jax.lax.rsqrt(var + BN_EPS)
        shift = betas[i] - mean * scale


# --------------------------------------------------------------------------------------
# Pure-JAX reference and parameter init.
# --------------------------------------------------------------------------------------
def mlp_reference(params, x, *, batch_norm=True):
    """Pure-JAX f32 mirror of the PyTorch nn.Sequential forward (train-mode BN)."""
    h = x
    num_layers = len(params["W"])
    for i in range(num_layers):
        h = h @ params["W"][i] + params["b"][i]
        if i < num_layers - 1:
            if batch_norm:
                mean = jnp.mean(h, axis=0, keepdims=True)
                var = jnp.mean((h - mean) ** 2, axis=0, keepdims=True)
                h = (h - mean) / jnp.sqrt(var + BN_EPS) * params["gamma"][i] + params["beta"][i]
            h = jnp.maximum(h, 0.0)
    return h


def init_params(key, layers):
    ws, bs, gammas, betas = [], [], [], []
    keys = jax.random.split(key, 3 * (len(layers) - 1))
    for i in range(len(layers) - 1):
        fan_in, fan_out = layers[i], layers[i + 1]
        bound = 1.0 / float(np.sqrt(fan_in))
        kw, kb, kg = keys[3 * i], keys[3 * i + 1], keys[3 * i + 2]
        ws.append(jax.random.uniform(kw, (fan_in, fan_out), jnp.float32, -bound, bound))
        bs.append(jax.random.uniform(kb, (1, fan_out), jnp.float32, -bound, bound))
        if i < len(layers) - 2:
            kg1, kg2 = jax.random.split(kg)
            gammas.append(1.0 + 0.1 * jax.random.normal(kg1, (1, fan_out), jnp.float32))
            betas.append(0.1 * jax.random.normal(kg2, (1, fan_out), jnp.float32))
        else:
            gammas.append(None)
            betas.append(None)
    return {"W": ws, "b": bs, "gamma": gammas, "beta": betas}


if __name__ == "__main__":
    layers = (16, 128, 64)      # NeuralCF-style MLP tower: Linear -> BN -> ReLU -> Linear
    batch = 200                 # NOT a multiple of 8*tile target (exercises masking, no pad waste)

    key = jax.random.PRNGKey(0)
    pkey, xkey = jax.random.split(key)
    params = init_params(pkey, layers)
    x = jax.random.normal(xkey, (batch, layers[0]), jnp.float32)

    fwd_bn = jax.jit(functools.partial(mlp_forward, batch_norm=True))
    fwd_nobn = jax.jit(functools.partial(mlp_forward, batch_norm=False))

    out_bn = jax.block_until_ready(fwd_bn(params, x))
    out_nobn = jax.block_until_ready(fwd_nobn(params, x))

    ref_bn = mlp_reference(params, x, batch_norm=True)
    ref_nobn = mlp_reference(params, x, batch_norm=False)

    # bf16 activations/weights (f32 matmul accumulation + f32 BN math) vs f32 reference.
    np.testing.assert_allclose(np.asarray(out_bn, dtype=np.float32),
                               np.asarray(ref_bn), rtol=5e-2, atol=5e-2)
    np.testing.assert_allclose(np.asarray(out_nobn, dtype=np.float32),
                               np.asarray(ref_nobn), rtol=5e-2, atol=5e-2)
    assert out_bn.shape == (batch, layers[-1])
    assert out_nobn.shape == (batch, layers[-1])
    print("KERNEL_OK")
</pallas_src>

<mosaic_0001>
module attributes {stable_mosaic.version = 11 : i64} {
  func.func @kernel(%arg0: i32, %arg1: memref<200x128xbf16, #tpu.memory_space<vmem>>, %arg2: memref<1x128xf32, #tpu.memory_space<vmem>>, %arg3: memref<1x128xf32, #tpu.memory_space<vmem>>, %arg4: memref<128x128xbf16, #tpu.memory_space<vmem>>, %arg5: memref<1x128xf32, #tpu.memory_space<vmem>>, %arg6: memref<200x128xf32, #tpu.memory_space<vmem>>) attributes {dimension_semantics = [#tpu.dimension_semantics<parallel>], iteration_bounds = array<i64: 1>, scalar_prefetch = 0 : i64, scratch_operands = 0 : i64, tpu.core_type = #tpu.core_type<tc>, window_params = [{transform_indices = @transform_0, window_bounds = array<i64: 200, 128>}, {pipeline_mode = #tpu.pipeline_mode<synchronous>, transform_indices = @transform_1, window_bounds = array<i64: 1, 128>}, {pipeline_mode = #tpu.pipeline_mode<synchronous>, transform_indices = @transform_2, window_bounds = array<i64: 1, 128>}, {pipeline_mode = #tpu.pipeline_mode<synchronous>, transform_indices = @transform_3, window_bounds = array<i64: 128, 128>}, {pipeline_mode = #tpu.pipeline_mode<synchronous>, transform_indices = @transform_4, window_bounds = array<i64: 1, 128>}, {transform_indices = @transform_5, window_bounds = array<i64: 200, 128>}]} {
    %c0 = arith.constant 0 : index
    %c0_0 = arith.constant 0 : index
    %0 = vector.load %arg1[%c0, %c0_0] : memref<200x128xbf16, #tpu.memory_space<vmem>>, vector<200x128xbf16>
    %1 = arith.extf %0 : vector<200x128xbf16> to vector<200x128xf32>
    %c0_1 = arith.constant 0 : index
    %c0_2 = arith.constant 0 : index
    %2 = vector.load %arg2[%c0_1, %c0_2] : memref<1x128xf32, #tpu.memory_space<vmem>>, vector<1x128xf32>
    %3 = vector.broadcast %2 : vector<1x128xf32> to vector<200x128xf32>
    %4 = arith.mulf %1, %3 : vector<200x128xf32>
    %c0_3 = arith.constant 0 : index
    %c0_4 = arith.constant 0 : index
    %5 = vector.load %arg3[%c0_3, %c0_4] : memref<1x128xf32, #tpu.memory_space<vmem>>, vector<1x128xf32>
    %6 = vector.broadcast %5 : vector<1x128xf32> to vector<200x128xf32>
    %7 = arith.addf %4, %6 : vector<200x128xf32>
    %cst = arith.constant 0.000000e+00 : f32
    %8 = vector.broadcast %cst : f32 to vector<200x128xf32>
    %9 = arith.maximumf %7, %8 : vector<200x128xf32>
    %10 = arith.truncf %9 : vector<200x128xf32> to vector<200x128xbf16>
    %c0_5 = arith.constant 0 : index
    %c0_6 = arith.constant 0 : index
    %11 = vector.load %arg4[%c0_5, %c0_6] : memref<128x128xbf16, #tpu.memory_space<vmem>>, vector<128x128xbf16>
    %cst_7 = arith.constant dense<0.000000e+00> : vector<200x128xf32>
    %12 = tpu.matmul %10, %11, %cst_7 {dimension_numbers = #tpu.dot_dimension_numbers<[1], [0], [0], [1], [0, 0, 1, 1], [], []>} : vector<200x128xbf16>, vector<128x128xbf16>, vector<200x128xf32> -> vector<200x128xf32>
    %c0_8 = arith.constant 0 : index
    %c0_9 = arith.constant 0 : index
    %13 = vector.load %arg5[%c0_8, %c0_9] : memref<1x128xf32, #tpu.memory_space<vmem>>, vector<1x128xf32>
    %14 = vector.broadcast %13 : vector<1x128xf32> to vector<200x128xf32>
    %15 = arith.addf %12, %14 : vector<200x128xf32>
    %c0_10 = arith.constant 0 : index
    %c0_11 = arith.constant 0 : index
    %16 = vector.load %arg6[%c0_10, %c0_11] : memref<200x128xf32, #tpu.memory_space<vmem>>, vector<200x128xf32>
    tpu.vector_store %arg6[%c0_10, %c0_11], %15 {strides = array<i32>} : memref<200x128xf32, #tpu.memory_space<vmem>>, vector<200x128xf32>,
    return
  }
  func.func @transform_0(%arg0: i32) -> (i32, i32) {
    %c0_i32 = arith.constant 0 : i32
    %c0_i32_0 = arith.constant 0 : i32
    return %arg0, %c0_i32 : i32, i32
  }
  func.func @transform_1(%arg0: i32) -> (i32, i32) {
    %c0_i32 = arith.constant 0 : i32
    %c0_i32_0 = arith.constant 0 : i32
    %c0_i32_1 = arith.constant 0 : i32
    return %c0_i32, %c0_i32_0 : i32, i32
  }
  func.func @transform_2(%arg0: i32) -> (i32, i32) {
    %c0_i32 = arith.constant 0 : i32
    %c0_i32_0 = arith.constant 0 : i32
    %c0_i32_1 = arith.constant 0 : i32
    return %c0_i32, %c0_i32_0 : i32, i32
  }
  func.func @transform_3(%arg0: i32) -> (i32, i32) {
    %c0_i32 = arith.constant 0 : i32
    %c0_i32_0 = arith.constant 0 : i32
    %c0_i32_1 = arith.constant 0 : i32
    return %c0_i32, %c0_i32_0 : i32, i32
  }
  func.func @transform_4(%arg0: i32) -> (i32, i32) {
    %c0_i32 = arith.constant 0 : i32
    %c0_i32_0 = arith.constant 0 : i32
    %c0_i32_1 = arith.constant 0 : i32
    return %c0_i32, %c0_i32_0 : i32, i32
  }
  func.func @transform_5(%arg0: i32) -> (i32, i32) {
    %c0_i32 = arith.constant 0 : i32
    %c0_i32_0 = arith.constant 0 : i32
    return %arg0, %c0_i32 : i32, i32
  }
}

module attributes {stable_mosaic.version = 11 : i64} {
  func.func @kernel(%arg0: i32, %arg1: memref<200x16xbf16, #tpu.memory_space<vmem>>, %arg2: memref<16x128xbf16, #tpu.memory_space<vmem>>, %arg3: memref<1x128xf32, #tpu.memory_space<vmem>>, %arg4: memref<200x128xbf16, #tpu.memory_space<vmem>>, %arg5: memref<8x128xf32, #tpu.memory_space<vmem>>) attributes {dimension_semantics = [#tpu.dimension_semantics<parallel>], iteration_bounds = array<i64: 1>, scalar_prefetch = 0 : i64, scratch_operands = 0 : i64, tpu.core_type = #tpu.core_type<tc>, window_params = [{transform_indices = @transform_0, window_bounds = array<i64: 200, 16>}, {pipeline_mode = #tpu.pipeline_mode<synchronous>, transform_indices = @transform_1, window_bounds = array<i64: 16, 128>}, {pipeline_mode = #tpu.pipeline_mode<synchronous>, transform_indices = @transform_2, window_bounds = array<i64: 1, 128>}, {transform_indices = @transform_3, window_bounds = array<i64: 200, 128>}, {transform_indices = @transform_4, window_bounds = array<i64: 8, 128>}]} {
    %c0 = arith.constant 0 : index
    %c0_0 = arith.constant 0 : index
    %0 = vector.load %arg1[%c0, %c0_0] : memref<200x16xbf16, #tpu.memory_space<vmem>>, vector<200x16xbf16>
    %c0_1 = arith.constant 0 : index
    %c0_2 = arith.constant 0 : index
    %1 = vector.load %arg2[%c0_1, %c0_2] : memref<16x128xbf16, #tpu.memory_space<vmem>>, vector<16x128xbf16>
    %cst = arith.constant dense<0.000000e+00> : vector<200x128xf32>
    %2 = tpu.matmul %0, %1, %cst {dimension_numbers = #tpu.dot_dimension_numbers<[1], [0], [0], [1], [0, 0, 1, 1], [], []>} : vector<200x16xbf16>, vector<16x128xbf16>, vector<200x128xf32> -> vector<200x128xf32>
    %c0_3 = arith.constant 0 : index
    %c0_4 = arith.constant 0 : index
    %3 = vector.load %arg3[%c0_3, %c0_4] : memref<1x128xf32, #tpu.memory_space<vmem>>, vector<1x128xf32>
    %4 = vector.broadcast %3 : vector<1x128xf32> to vector<200x128xf32>
    %5 = arith.addf %2, %4 : vector<200x128xf32>
    %6 = arith.truncf %5 : vector<200x128xf32> to vector<200x128xbf16>
    %c0_5 = arith.constant 0 : index
    %c0_6 = arith.constant 0 : index
    %7 = vector.load %arg4[%c0_5, %c0_6] : memref<200x128xbf16, #tpu.memory_space<vmem>>, vector<200x128xbf16>
    tpu.vector_store %arg4[%c0_5, %c0_6], %6 {strides = array<i32>} : memref<200x128xbf16, #tpu.memory_space<vmem>>, vector<200x128xbf16>,
    %c200_i32 = arith.constant 200 : i32
    %8 = arith.muli %arg0, %c200_i32 : i32
    %9 = tpu.iota {dimensions = array<i32: 0>} : vector<200x1xi32>
    %10 = vector.broadcast %8 : i32 to vector<200x1xi32>
    %11 = arith.addi %9, %10 : vector<200x1xi32>
    %c200_i32_7 = arith.constant 200 : i32
    %12 = vector.broadcast %c200_i32_7 : i32 to vector<200x1xi32>
    %13 = arith.cmpi slt, %11, %12 : vector<200x1xi32>
    %14 = arith.extui %13 : vector<200x1xi1> to vector<200x1xi32>
    %15 = arith.sitofp %14 : vector<200x1xi32> to vector<200x1xf32>
    %16 = vector.broadcast %15 : vector<200x1xf32> to vector<200x128xf32>
    %17 = arith.mulf %5, %16 : vector<200x128xf32>
    %cst_8 = arith.constant dense<0.000000e+00> : vector<128xf32>
    %18 = vector.multi_reduction <add>, %17, %cst_8 [0] : vector<200x128xf32> to vector<128xf32>
    %19 = vector.shape_cast %18 : vector<128xf32> to vector<1x128xf32>
    %20 = arith.mulf %17, %5 : vector<200x128xf32>
    %cst_9 = arith.constant dense<0.000000e+00> : vector<128xf32>
    %21 = vector.multi_reduction <add>, %20, %cst_9 [0] : vector<200x128xf32> to vector<128xf32>
    %22 = vector.shape_cast %21 : vector<128xf32> to vector<1x128xf32>
    %23 = tpu.iota {dimensions = array<i32: 0>} : vector<8x128xi32>
    %c0_i32 = arith.constant 0 : i32
    %24 = vector.broadcast %c0_i32 : i32 to vector<8x128xi32>
    %25 = arith.cmpi eq, %23, %24 : vector<8x128xi32>
    %c1_i32 = arith.constant 1 : i32
    %26 = vector.broadcast %c1_i32 : i32 to vector<8x128xi32>
    %27 = arith.cmpi eq, %23, %26 : vector<8x128xi32>
    %cst_10 = arith.constant 0.000000e+00 : f32
    %28 = vector.shape_cast %22 : vector<1x128xf32> to vector<1x128xf32>
    %29 = vector.broadcast %28 : vector<1x128xf32> to vector<8x128xf32>
    %30 = vector.broadcast %cst_10 : f32 to vector<8x128xf32>
    %31 = arith.select %27, %29, %30 : vector<8x128xi1>, vector<8x128xf32>
    %32 = vector.shape_cast %19 : vector<1x128xf32> to vector<1x128xf32>
    %33 = vector.broadcast %32 : vector<1x128xf32> to vector<8x128xf32>
    %34 = arith.select %25, %33, %31 : vector<8x128xi1>, vector<8x128xf32>
    %c0_11 = arith.constant 0 : index
    %c0_12 = arith.constant 0 : index
    %35 = vector.load %arg5[%c0_11, %c0_12] : memref<8x128xf32, #tpu.memory_space<vmem>>, vector<8x128xf32>
    tpu.vector_store %arg5[%c0_11, %c0_12], %34 {strides = array<i32>} : memref<8x128xf32, #tpu.memory_space<vmem>>, vector<8x128xf32>,
    return
  }
  func.func @transform_0(%arg0: i32) -> (i32, i32) {
    %c0_i32 = arith.constant 0 : i32
    %c0_i32_0 = arith.constant 0 : i32
    return %arg0, %c0_i32 : i32, i32
  }
  func.func @transform_1(%arg0: i32) -> (i32, i32) {
    %c0_i32 = arith.constant 0 : i32
    %c0_i32_0 = arith.constant 0 : i32
    %c0_i32_1 = arith.constant 0 : i32
    return %c0_i32, %c0_i32_0 : i32, i32
  }
  func.func @transform_2(%arg0: i32) -> (i32, i32) {
    %c0_i32 = arith.constant 0 : i32
    %c0_i32_0 = arith.constant 0 : i32
    %c0_i32_1 = arith.constant 0 : i32
    return %c0_i32, %c0_i32_0 : i32, i32
  }
  func.func @transform_3(%arg0: i32) -> (i32, i32) {
    %c0_i32 = arith.constant 0 : i32
    %c0_i32_0 = arith.constant 0 : i32
    return %arg0, %c0_i32 : i32, i32
  }
  func.func @transform_4(%arg0: i32) -> (i32, i32) {
    %c0_i32 = arith.constant 0 : i32
    %c0_i32_0 = arith.constant 0 : i32
    return %arg0, %c0_i32 : i32, i32
  }
}

</mosaic_0001>

<llo_original>
// kernel: mlp_forward.3
$region0: #{mlp_forward.3}
  #allocation0 [shape = 'u32[]', space=smem, size = 0x4, offset = 0x4, fixed_abs, tag = 'smem constant byte address 0x4 - core index']
  #allocation1 [shape = 'u32[72,128]{1,0:T(1,128)}', space=vmem, size = 0x9000, scoped, tag = 'internal scratch']
  %s0 = inlined_call_operand.vmem [shape: bf16[200,128], index: 0, kind: input, shape index: {}]
  %s1 = inlined_call_operand.vmem [shape: f32[1,128], index: 1, kind: input, shape index: {}]
  %s2 = inlined_call_operand.vmem [shape: f32[1,128], index: 2, kind: input, shape index: {}]
  %s3 = inlined_call_operand.vmem [shape: bf16[128,128], index: 3, kind: input, shape index: {}]
  %s4 = inlined_call_operand.vmem [shape: f32[1,128], index: 4, kind: input, shape index: {}]
  %s5 = inlined_call_operand.vmem [shape: f32[200,128], index: 5, kind: output, shape index: {}]
  %s6 = sld [smem:[#allocation0]]
  $region30: #{mlp_forward.3} parent=0
    _
  %s8 = ssub.s32 1, %s6
  %s9 = scalar_select 0, %s8, %s6
  // Predicated region
  $region2: #{mlp_forward.3} parent=0 // pred_check
    _
  $region3: #{mlp_forward.3} parent=0 // pred_check_branch
    %11 = sbr.rel (0) target = $region5
  $region4: #{mlp_forward.3} parent=0 // pred_region
    _
  $region5: #{mlp_forward.3} parent=0 // pred_fallthru
    _
  // Predicated region
  $region6: #{mlp_forward.3} parent=0 // pred_check
    _
  $region7: #{mlp_forward.3} parent=0 // pred_check_branch
    %13 = sbr.rel (0) target = $region9
  $region8: #{mlp_forward.3} parent=0 // pred_region
    _
  $region9: #{mlp_forward.3} parent=0 // pred_fallthru
    _
  // Predicated region
  $region10: #{mlp_forward.3} parent=0 // pred_check
    _
  $region11: #{mlp_forward.3} parent=0 // pred_check_branch
    %15 = sbr.rel (0) target = $region13
  $region12: #{mlp_forward.3} parent=0 // pred_region
    _
  $region13: #{mlp_forward.3} parent=0 // pred_fallthru
    _
  // Predicated region
  $region14: #{mlp_forward.3} parent=0 // pred_check
    _
  $region15: #{mlp_forward.3} parent=0 // pred_check_branch
    %17 = sbr.rel (0) target = $region17
  $region16: #{mlp_forward.3} parent=0 // pred_region
    _
  $region17: #{mlp_forward.3} parent=0 // pred_fallthru
    _
  // Predicated region
  $region18: #{mlp_forward.3} parent=0 // pred_check
    _
  $region19: #{mlp_forward.3} parent=0 // pred_check_branch
    %19 = sbr.rel (0) target = $region21
  $region20: #{mlp_forward.3} parent=0 // pred_region
    _
  $region21: #{mlp_forward.3} parent=0 // pred_fallthru
    _
  %v20 = vld [vmem:[%s0] sm:$0xf]
  %v21 = vld [vmem:[%s0 + $0x4] sm:$0xf]
  %v22 = vld [vmem:[%s0 + $0x8] sm:$0xf]
  %v23 = vld [vmem:[%s0 + $0xc] sm:$0xf]
  %v24 = vld [vmem:[%s0 + $0x10] sm:$0xf]
  %v25 = vld [vmem:[%s0 + $0x14] sm:$0xf]
  %v26 = vld [vmem:[%s0 + $0x18] sm:$0xf]
  %v27 = vld [vmem:[%s0 + $0x1c] sm:$0xf]
  %v28 = vld [vmem:[%s0 + $0x20] sm:$0xf]
  %v29 = vld [vmem:[%s0 + $0x24] sm:$0xf]
  %v30 = vld [vmem:[%s0 + $0x28] sm:$0xf]
  %v31 = vld [vmem:[%s0 + $0x2c] sm:$0xf]
  %v32 = vld [vmem:[%s0 + $0x30] sm:$0xf]
  %v33 = vld [vmem:[%s0 + $0x34] sm:$0xf]
  %v34 = vld [vmem:[%s0 + $0x38] sm:$0xf]
  %v35 = vld [vmem:[%s0 + $0x3c] sm:$0xf]
  %v36 = vld [vmem:[%s0 + $0x40] sm:$0xf]
  %v37 = vld [vmem:[%s0 + $0x44] sm:$0xf]
  %v38 = vld [vmem:[%s0 + $0x48] sm:$0xf]
  %v39 = vld [vmem:[%s0 + $0x4c] sm:$0xf]
  %v40 = vld [vmem:[%s0 + $0x50] sm:$0xf]
  %v41 = vld [vmem:[%s0 + $0x54] sm:$0xf]
  %v42 = vld [vmem:[%s0 + $0x58] sm:$0xf]
  %v43 = vld [vmem:[%s0 + $0x5c] sm:$0xf]
  %v44 = vld [vmem:[%s0 + $0x60] sm:$0xf]
  %v45 = vunpack.c.l.bf16 %v20
  %v46 = vunpack.c.l.bf16 %v21
  %v47 = vunpack.c.l.bf16 %v22
  %v48 = vunpack.c.l.bf16 %v23
  %v49 = vunpack.c.l.bf16 %v24
  %v50 = vunpack.c.l.bf16 %v25
  %v51 = vunpack.c.l.bf16 %v26
  %v52 = vunpack.c.l.bf16 %v27
  %v53 = vunpack.c.l.bf16 %v28
  %v54 = vunpack.c.l.bf16 %v29
  %v55 = vunpack.c.l.bf16 %v30
  %v56 = vunpack.c.l.bf16 %v31
  %v57 = vunpack.c.l.bf16 %v32
  %v58 = vunpack.c.l.bf16 %v33
  %v59 = vunpack.c.l.bf16 %v34
  %v60 = vunpack.c.l.bf16 %v35
  %v61 = vunpack.c.l.bf16 %v36
  %v62 = vunpack.c.l.bf16 %v37
  %v63 = vunpack.c.l.bf16 %v38
  %v64 = vunpack.c.l.bf16 %v39
  %v65 = vunpack.c.l.bf16 %v40
  %v66 = vunpack.c.l.bf16 %v41
  %v67 = vunpack.c.l.bf16 %v42
  %v68 = vunpack.c.l.bf16 %v43
  %v69 = vunpack.c.l.bf16 %v44
  %v70 = vld [vmem:[%s1] sm:$0x1]
  %v72 = vperm.slane %v70, 0
  %v74 = vmul.f32 %v45, %v72
  %v75 = vmul.f32 %v46, %v72
  %v76 = vmul.f32 %v47, %v72
  %v77 = vmul.f32 %v48, %v72
  %v78 = vmul.f32 %v49, %v72
  %v79 = vmul.f32 %v50, %v72
  %v80 = vmul.f32 %v51, %v72
  %v81 = vmul.f32 %v52, %v72
  %v82 = vmul.f32 %v53, %v72
  %v83 = vmul.f32 %v54, %v72
  %v84 = vmul.f32 %v55, %v72
  %v85 = vmul.f32 %v56, %v72
  %v86 = vmul.f32 %v57, %v72
  %v87 = vmul.f32 %v58, %v72
  %v88 = vmul.f32 %v59, %v72
  %v89 = vmul.f32 %v60, %v72
  %v90 = vmul.f32 %v61, %v72
  %v91 = vmul.f32 %v62, %v72
  %v92 = vmul.f32 %v63, %v72
  %v93 = vmul.f32 %v64, %v72
  %v94 = vmul.f32 %v65, %v72
  %v95 = vmul.f32 %v66, %v72
  %v96 = vmul.f32 %v67, %v72
  %v97 = vmul.f32 %v68, %v72
  %v98 = vmul.f32 %v69, %v72
  %v99 = vld [vmem:[%s2] sm:$0x1]
  %v101 = vperm.slane %v99, 0
  %v103 = vadd.f32 %v74, %v101
  %v104 = vadd.f32 %v75, %v101
  %v105 = vadd.f32 %v76, %v101
  %v106 = vadd.f32 %v77, %v101
  %v107 = vadd.f32 %v78, %v101
  %v108 = vadd.f32 %v79, %v101
  %v109 = vadd.f32 %v80, %v101
  %v110 = vadd.f32 %v81, %v101
  %v111 = vadd.f32 %v82, %v101
  %v112 = vadd.f32 %v83, %v101
  %v113 = vadd.f32 %v84, %v101
  %v114 = vadd.f32 %v85, %v101
  %v115 = vadd.f32 %v86, %v101
  %v116 = vadd.f32 %v87, %v101
  %v117 = vadd.f32 %v88, %v101
  %v118 = vadd.f32 %v89, %v101
  %v119 = vadd.f32 %v90, %v101
  %v120 = vadd.f32 %v91, %v101
  %v121 = vadd.f32 %v92, %v101
  %v122 = vadd.f32 %v93, %v101
  %v123 = vadd.f32 %v94, %v101
  %v124 = vadd.f32 %v95, %v101
  %v125 = vadd.f32 %v96, %v101
  %v126 = vadd.f32 %v97, %v101
  %v127 = vadd.f32 %v98, %v101
  %v128 = vmax.f32 %v103, 0.0
  %v129 = vmax.f32 %v104, 0.0
  %v130 = vmax.f32 %v105, 0.0
  %v131 = vmax.f32 %v106, 0.0
  %v132 = vmax.f32 %v107, 0.0
  %v133 = vmax.f32 %v108, 0.0
  %v134 = vmax.f32 %v109, 0.0
  %v135 = vmax.f32 %v110, 0.0
  %v136 = vmax.f32 %v111, 0.0
  %v137 = vmax.f32 %v112, 0.0
  %v138 = vmax.f32 %v113, 0.0
  %v139 = vmax.f32 %v114, 0.0
  %v140 = vmax.f32 %v115, 0.0
  %v141 = vmax.f32 %v116, 0.0
  %v142 = vmax.f32 %v117, 0.0
  %v143 = vmax.f32 %v118, 0.0
  %v144 = vmax.f32 %v119, 0.0
  %v145 = vmax.f32 %v120, 0.0
  %v146 = vmax.f32 %v121, 0.0
  %v147 = vmax.f32 %v122, 0.0
  %v148 = vmax.f32 %v123, 0.0
  %v149 = vmax.f32 %v124, 0.0
  %v150 = vmax.f32 %v125, 0.0
  %v151 = vmax.f32 %v126, 0.0
  %v152 = vmax.f32 %v127, 0.0
  %v153 = vpack.c.bf16 %v129, %v128
  %v154 = vpack.c.bf16 %v131, %v130
  %v155 = vpack.c.bf16 %v133, %v132
  %v156 = vpack.c.bf16 %v135, %v134
  %v157 = vpack.c.bf16 %v137, %v136
  %v158 = vpack.c.bf16 %v139, %v138
  %v159 = vpack.c.bf16 %v141, %v140
  %v160 = vpack.c.bf16 %v143, %v142
  %v161 = vpack.c.bf16 %v145, %v144
  %v162 = vpack.c.bf16 %v147, %v146
  %v163 = vpack.c.bf16 %v149, %v148
  %v164 = vpack.c.bf16 %v151, %v150
  %v165 = vpack.c.bf16 %v152, %v152
  %v166 = vld [vmem:[%s3] sm:$0xf]
  %v167 = vld [vmem:[%s3 + $0x4] sm:$0xf]
  %v168 = vld [vmem:[%s3 + $0x8] sm:$0xf]
  %v169 = vld [vmem:[%s3 + $0xc] sm:$0xf]
  %v170 = vld [vmem:[%s3 + $0x10] sm:$0xf]
  %v171 = vld [vmem:[%s3 + $0x14] sm:$0xf]
  %v172 = vld [vmem:[%s3 + $0x18] sm:$0xf]
  %v173 = vld [vmem:[%s3 + $0x1c] sm:$0xf]
  %v174 = vld [vmem:[%s3 + $0x20] sm:$0xf]
  %v175 = vld [vmem:[%s3 + $0x24] sm:$0xf]
  %v176 = vld [vmem:[%s3 + $0x28] sm:$0xf]
  %v177 = vld [vmem:[%s3 + $0x2c] sm:$0xf]
  %v178 = vld [vmem:[%s3 + $0x30] sm:$0xf]
  %v179 = vld [vmem:[%s3 + $0x34] sm:$0xf]
  %v180 = vld [vmem:[%s3 + $0x38] sm:$0xf]
  %v181 = vld [vmem:[%s3 + $0x3c] sm:$0xf]
  %v182 = vld [vmem:[%s4] sm:$0x1]
  %v184 = vperm.slane %v182, 0
  %v202 = vunpack.c.l.b16 %v166
  %v203 = vunpack.c.l.b16 %v167
  %v204 = vunpack.c.l.b16 %v168
  %v205 = vunpack.c.l.b16 %v169
  %v206 = vunpack.c.l.b16 %v170
  %v207 = vunpack.c.l.b16 %v171
  %v208 = vunpack.c.l.b16 %v172
  %v209 = vunpack.c.l.b16 %v173
  %v210 = vunpack.c.l.b16 %v174
  %v211 = vunpack.c.l.b16 %v175
  %v212 = vunpack.c.l.b16 %v176
  %v213 = vunpack.c.l.b16 %v177
  %v214 = vunpack.c.l.b16 %v178
  %v215 = vunpack.c.l.b16 %v179
  %v216 = vunpack.c.l.b16 %v180
  %v217 = vunpack.c.l.b16 %v181
  %v218 = vpack.c.b16 %v203, %v202
  %v219 = vpack.c.b16 %v205, %v204
  %v220 = vpack.c.b16 %v207, %v206
  %v221 = vpack.c.b16 %v209, %v208
  %v222 = vpack.c.b16 %v211, %v210
  %v223 = vpack.c.b16 %v213, %v212
  %v224 = vpack.c.b16 %v215, %v214
  %v225 = vpack.c.b16 %v217, %v216
  %234 = vmatpush.bf16.msra.mxu0 %v225
  %235 = vmatpush.bf16.msra.mxu0 %v224
  %236 = vmatpush.bf16.msra.mxu0 %v223
  %237 = vmatpush.bf16.msra.mxu0 %v222
  %238 = vmatpush.bf16.msra.mxu0 %v221
  %239 = vmatpush.bf16.msra.mxu0 %v220
  %240 = vmatpush.bf16.msra.mxu0 %v219
  %241 = vmatpush.bf16.msra.mxu0 %v218
  %242 = vmatmul.bf16.gmra.mxu0 %v153
  %v243 = vpop.f32.mrf.mxu0
  %v244 = vadd.f32 %v184, %v243
  %v245 = vpop.f32.mrf.mxu0
  %v246 = vadd.f32 %v184, %v245
  %247 = vmatmul.bf16.gmra.mxu0 %v154
  %v248 = vpop.f32.mrf.mxu0
  %v249 = vadd.f32 %v184, %v248
  %v250 = vpop.f32.mrf.mxu0
  %v251 = vadd.f32 %v184, %v250
  %252 = vmatmul.bf16.gmra.mxu0 %v155
  %v253 = vpop.f32.mrf.mxu0
  %v254 = vadd.f32 %v184, %v253
  %v255 = vpop.f32.mrf.mxu0
  %v256 = vadd.f32 %v184, %v255
  %257 = vmatmul.bf16.gmra.mxu0 %v156
  %v258 = vpop.f32.mrf.mxu0
  %v259 = vadd.f32 %v184, %v258
  %v260 = vpop.f32.mrf.mxu0
  %v261 = vadd.f32 %v184, %v260
  %262 = vmatmul.bf16.gmra.mxu0 %v157
  %v263 = vpop.f32.mrf.mxu0
  %v264 = vadd.f32 %v184, %v263
  %v265 = vpop.f32.mrf.mxu0
  %v266 = vadd.f32 %v184, %v265
  %267 = vmatmul.bf16.gmra.mxu0 %v158
  %v268 = vpop.f32.mrf.mxu0
  %v269 = vadd.f32 %v184, %v268
  %v270 = vpop.f32.mrf.mxu0
  %v271 = vadd.f32 %v184, %v270
  %272 = vmatmul.bf16.gmra.mxu0 %v159
  %v273 = vpop.f32.mrf.mxu0
  %v274 = vadd.f32 %v184, %v273
  %v275 = vpop.f32.mrf.mxu0
  %v276 = vadd.f32 %v184, %v275
  %277 = vmatmul.bf16.gmra.mxu0 %v160
  %v278 = vpop.f32.mrf.mxu0
  %v279 = vadd.f32 %v184, %v278
  %v280 = vpop.f32.mrf.mxu0
  %v281 = vadd.f32 %v184, %v280
  %282 = vmatmul.bf16.gmra.mxu0 %v161
  %v283 = vpop.f32.mrf.mxu0
  %v284 = vadd.f32 %v184, %v283
  %v285 = vpop.f32.mrf.mxu0
  %v286 = vadd.f32 %v184, %v285
  %287 = vmatmul.bf16.gmra.mxu0 %v162
  %v288 = vpop.f32.mrf.mxu0
  %v289 = vadd.f32 %v184, %v288
  %v290 = vpop.f32.mrf.mxu0
  %v291 = vadd.f32 %v184, %v290
  %292 = vmatmul.bf16.gmra.mxu0 %v163
  %v293 = vpop.f32.mrf.mxu0
  %v294 = vadd.f32 %v184, %v293
  %v295 = vpop.f32.mrf.mxu0
  %v296 = vadd.f32 %v184, %v295
  %297 = vmatmul.bf16.gmra.mxu0 %v164
  %v298 = vpop.f32.mrf.mxu0
  %v299 = vadd.f32 %v184, %v298
  %v300 = vpop.f32.mrf.mxu0
  %v301 = vadd.f32 %v184, %v300
  %302 = vmatmul.bf16.gmra.mxu0 %v165
  %v303 = vpop.f32.mrf.mxu0
  %v304 = vadd.f32 %v184, %v303
  %v305 = vpop.f32.mrf.mxu0
  %306 = vdwg.mxu0
  %307 = vst [vmem:[%s5] sm:$0xff] %v244
  %308 = vst [vmem:[%s5 + $0x8] sm:$0xff] %v246
  %309 = vst [vmem:[%s5 + $0x10] sm:$0xff] %v249
  %310 = vst [vmem:[%s5 + $0x18] sm:$0xff] %v251
  %311 = vst [vmem:[%s5 + $0x20] sm:$0xff] %v254
  %312 = vst [vmem:[%s5 + $0x28] sm:$0xff] %v256
  %313 = vst [vmem:[%s5 + $0x30] sm:$0xff] %v259
  %314 = vst [vmem:[%s5 + $0x38] sm:$0xff] %v261
  %315 = vst [vmem:[%s5 + $0x40] sm:$0xff] %v264
  %316 = vst [vmem:[%s5 + $0x48] sm:$0xff] %v266
  %317 = vst [vmem:[%s5 + $0x50] sm:$0xff] %v269
  %318 = vst [vmem:[%s5 + $0x58] sm:$0xff] %v271
  %319 = vst [vmem:[%s5 + $0x60] sm:$0xff] %v274
  %320 = vst [vmem:[%s5 + $0x68] sm:$0xff] %v276
  %321 = vst [vmem:[%s5 + $0x70] sm:$0xff] %v279
  %322 = vst [vmem:[%s5 + $0x78] sm:$0xff] %v281
  %323 = vst [vmem:[%s5 + $0x80] sm:$0xff] %v284
  %324 = vst [vmem:[%s5 + $0x88] sm:$0xff] %v286
  %325 = vst [vmem:[%s5 + $0x90] sm:$0xff] %v289
  %326 = vst [vmem:[%s5 + $0x98] sm:$0xff] %v291
  %327 = vst [vmem:[%s5 + $0xa0] sm:$0xff] %v294
  %328 = vst [vmem:[%s5 + $0xa8] sm:$0xff] %v296
  %329 = vst [vmem:[%s5 + $0xb0] sm:$0xff] %v299
  %330 = vst [vmem:[%s5 + $0xb8] sm:$0xff] %v301
  %331 = vst [vmem:[%s5 + $0xc0] sm:$0xff] %v304
  // Predicated region
  $region22: #{mlp_forward.3} parent=0 // pred_check
    _
  $region23: #{mlp_forward.3} parent=0 // pred_check_branch
    %333 = sbr.rel (0) target = $region25
  $region24: #{mlp_forward.3} parent=0 // pred_region
    _
  $region25: #{mlp_forward.3} parent=0 // pred_fallthru
    _
  // Predicated region
  $region26: #{mlp_forward.3} parent=0 // pred_check
    _
  $region27: #{mlp_forward.3} parent=0 // pred_check_branch
    %335 = sbr.rel (0) target = $region29
  $region28: #{mlp_forward.3} parent=0 // pred_region
    _
  $region29: #{mlp_forward.3} parent=0 // pred_fallthru
    _

// kernel: mlp_forward.2
$region0: #{mlp_forward.2}
  #allocation0 [shape = 'u32[]', space=smem, size = 0x4, offset = 0x4, fixed_abs, tag = 'smem constant byte address 0x4 - core index']
  #allocation1 [shape = 'u32[72,128]{1,0:T(1,128)}', space=vmem, size = 0x9000, scoped, tag = 'internal scratch']
  %s0 = inlined_call_operand.vmem [shape: bf16[200,16], index: 0, kind: input, shape index: {}]
  %s1 = inlined_call_operand.vmem [shape: bf16[16,128], index: 1, kind: input, shape index: {}]
  %s2 = inlined_call_operand.vmem [shape: f32[1,128], index: 2, kind: input, shape index: {}]
  %s3 = inlined_call_operand.vmem [shape: bf16[200,128], index: 3, kind: output, shape index: {0}]
  %s4 = inlined_call_operand.vmem [shape: f32[8,128], index: 4, kind: output, shape index: {1}]
  %5 = xla_tuple %s3, %s4
  %s6 = sld [smem:[#allocation0]]
  $region30: #{mlp_forward.2} parent=0
    _
  %s8 = ssub.s32 1, %s6
  %s9 = scalar_select 0, %s8, %s6
  // Predicated region
  $region2: #{mlp_forward.2} parent=0 // pred_check
    _
  $region3: #{mlp_forward.2} parent=0 // pred_check_branch
    %11 = sbr.rel (0) target = $region5
  $region4: #{mlp_forward.2} parent=0 // pred_region
    _
  $region5: #{mlp_forward.2} parent=0 // pred_fallthru
    _
  // Predicated region
  $region6: #{mlp_forward.2} parent=0 // pred_check
    _
  $region7: #{mlp_forward.2} parent=0 // pred_check_branch
    %13 = sbr.rel (0) target = $region9
  $region8: #{mlp_forward.2} parent=0 // pred_region
    _
  $region9: #{mlp_forward.2} parent=0 // pred_fallthru
    _
  // Predicated region
  $region10: #{mlp_forward.2} parent=0 // pred_check
    _
  $region11: #{mlp_forward.2} parent=0 // pred_check_branch
    %15 = sbr.rel (0) target = $region13
  $region12: #{mlp_forward.2} parent=0 // pred_region
    _
  $region13: #{mlp_forward.2} parent=0 // pred_fallthru
    _
  %v17 = vld [vmem:[%s0] sm:$0xf]
  %v18 = vld [vmem:[%s0 + $0x4] sm:$0xf]
  %v19 = vld [vmem:[%s0 + $0x8] sm:$0xf]
  %v20 = vld [vmem:[%s0 + $0xc] sm:$0xf]
  %v21 = vld [vmem:[%s0 + $0x10] sm:$0xf]
  %v22 = vld [vmem:[%s0 + $0x14] sm:$0xf]
  %v23 = vld [vmem:[%s0 + $0x18] sm:$0xf]
  %v24 = vld [vmem:[%s0 + $0x1c] sm:$0xf]
  %v25 = vld [vmem:[%s0 + $0x20] sm:$0xf]
  %v26 = vld [vmem:[%s0 + $0x24] sm:$0xf]
  %v27 = vld [vmem:[%s0 + $0x28] sm:$0xf]
  %v28 = vld [vmem:[%s0 + $0x2c] sm:$0xf]
  %v29 = vld [vmem:[%s0 + $0x30] sm:$0xf]
  %v30 = vld [vmem:[%s0 + $0x34] sm:$0xf]
  %v31 = vld [vmem:[%s0 + $0x38] sm:$0xf]
  %v32 = vld [vmem:[%s0 + $0x3c] sm:$0xf]
  %v33 = vld [vmem:[%s0 + $0x40] sm:$0xf]
  %v34 = vld [vmem:[%s0 + $0x44] sm:$0xf]
  %v35 = vld [vmem:[%s0 + $0x48] sm:$0xf]
  %v36 = vld [vmem:[%s0 + $0x4c] sm:$0xf]
  %v37 = vld [vmem:[%s0 + $0x50] sm:$0xf]
  %v38 = vld [vmem:[%s0 + $0x54] sm:$0xf]
  %v39 = vld [vmem:[%s0 + $0x58] sm:$0xf]
  %v40 = vld [vmem:[%s0 + $0x5c] sm:$0xf]
  %v41 = vld [vmem:[%s0 + $0x60] sm:$0xf]
  %v42 = vld [vmem:[%s1] sm:$0xf]
  %v43 = vld [vmem:[%s1 + $0x4] sm:$0xf]
  %v44 = vld [vmem:[%s2] sm:$0x1]
  %v46 = vperm.slane %v44, 0
  %v73 = vunpack.c.l.b16 %v17
  %v74 = vunpack.c.l.b16 %v18
  %v75 = vunpack.c.l.b16 %v19
  %v76 = vunpack.c.l.b16 %v20
  %v77 = vunpack.c.l.b16 %v21
  %v78 = vunpack.c.l.b16 %v22
  %v79 = vunpack.c.l.b16 %v23
  %v80 = vunpack.c.l.b16 %v24
  %v81 = vunpack.c.l.b16 %v25
  %v82 = vunpack.c.l.b16 %v26
  %v83 = vunpack.c.l.b16 %v27
  %v84 = vunpack.c.l.b16 %v28
  %v85 = vunpack.c.l.b16 %v29
  %v86 = vunpack.c.l.b16 %v30
  %v87 = vunpack.c.l.b16 %v31
  %v88 = vunpack.c.l.b16 %v32
  %v89 = vunpack.c.l.b16 %v33
  %v90 = vunpack.c.l.b16 %v34
  %v91 = vunpack.c.l.b16 %v35
  %v92 = vunpack.c.l.b16 %v36
  %v93 = vunpack.c.l.b16 %v37
  %v94 = vunpack.c.l.b16 %v38
  %v95 = vunpack.c.l.b16 %v39
  %v96 = vunpack.c.l.b16 %v40
  %v97 = vunpack.c.l.b16 %v41
  %v98 = vpack.c.b16 %v74, %v73
  %v99 = vpack.c.b16 %v76, %v75
  %v100 = vpack.c.b16 %v78, %v77
  %v101 = vpack.c.b16 %v80, %v79
  %v102 = vpack.c.b16 %v82, %v81
  %v103 = vpack.c.b16 %v84, %v83
  %v104 = vpack.c.b16 %v86, %v85
  %v105 = vpack.c.b16 %v88, %v87
  %v106 = vpack.c.b16 %v90, %v89
  %v107 = vpack.c.b16 %v92, %v91
  %v108 = vpack.c.b16 %v94, %v93
  %v109 = vpack.c.b16 %v96, %v95
  %v110 = vpack.c.b16 %v97, %v97
  %v113 = vunpack.c.l.b16 %v42
  %v114 = vunpack.c.l.b16 %v43
  %v115 = vpack.c.b16 %v114, %v113
  %vm117 = vcmask 130048
  %v119 = vsel %vm117, %v98, 0
  %v122 = vsel %vm117, %v99, 0
  %v125 = vsel %vm117, %v100, 0
  %v128 = vsel %vm117, %v101, 0
  %v131 = vsel %vm117, %v102, 0
  %v134 = vsel %vm117, %v103, 0
  %v137 = vsel %vm117, %v104, 0
  %v140 = vsel %vm117, %v105, 0
  %v143 = vsel %vm117, %v106, 0
  %v146 = vsel %vm117, %v107, 0
  %v149 = vsel %vm117, %v108, 0
  %v152 = vsel %vm117, %v109, 0
  %v155 = vsel %vm117, %v110, 0
  %157 = vmatpush.bf16.msra.mxu0 0
  %158 = vmatpush.bf16.msra.mxu0 0
  %159 = vmatpush.bf16.msra.mxu0 0
  %160 = vmatpush.bf16.msra.mxu0 0
  %161 = vmatpush.bf16.msra.mxu0 0
  %162 = vmatpush.bf16.msra.mxu0 0
  %163 = vmatpush.bf16.msra.mxu0 0
  %164 = vmatpush.bf16.msra.mxu0 %v115
  %165 = vmatmul.bf16.gmra.mxu0 %v119
  %v166 = vpop.f32.mrf.mxu0
  %v167 = vadd.f32 %v46, %v166
  %v168 = vpop.f32.mrf.mxu0
  %v169 = vadd.f32 %v46, %v168
  %170 = vmatmul.bf16.gmra.mxu0 %v122
  %v171 = vpop.f32.mrf.mxu0
  %v172 = vadd.f32 %v46, %v171
  %v173 = vpop.f32.mrf.mxu0
  %v174 = vadd.f32 %v46, %v173
  %175 = vmatmul.bf16.gmra.mxu0 %v125
  %v176 = vpop.f32.mrf.mxu0
  %v177 = vadd.f32 %v46, %v176
  %v178 = vpop.f32.mrf.mxu0
  %v179 = vadd.f32 %v46, %v178
  %180 = vmatmul.bf16.gmra.mxu0 %v128
  %v181 = vpop.f32.mrf.mxu0
  %v182 = vadd.f32 %v46, %v181
  %v183 = vpop.f32.mrf.mxu0
  %v184 = vadd.f32 %v46, %v183
  %185 = vmatmul.bf16.gmra.mxu0 %v131
  %v186 = vpop.f32.mrf.mxu0
  %v187 = vadd.f32 %v46, %v186
  %v188 = vpop.f32.mrf.mxu0
  %v189 = vadd.f32 %v46, %v188
  %190 = vmatmul.bf16.gmra.mxu0 %v134
  %v191 = vpop.f32.mrf.mxu0
  %v192 = vadd.f32 %v46, %v191
  %v193 = vpop.f32.mrf.mxu0
  %v194 = vadd.f32 %v46, %v193
  %195 = vmatmul.bf16.gmra.mxu0 %v137
  %v196 = vpop.f32.mrf.mxu0
  %v197 = vadd.f32 %v46, %v196
  %v198 = vpop.f32.mrf.mxu0
  %v199 = vadd.f32 %v46, %v198
  %200 = vmatmul.bf16.gmra.mxu0 %v140
  %v201 = vpop.f32.mrf.mxu0
  %v202 = vadd.f32 %v46, %v201
  %v203 = vpop.f32.mrf.mxu0
  %v204 = vadd.f32 %v46, %v203
  %205 = vmatmul.bf16.gmra.mxu0 %v143
  %v206 = vpop.f32.mrf.mxu0
  %v207 = vadd.f32 %v46, %v206
  %v208 = vpop.f32.mrf.mxu0
  %v209 = vadd.f32 %v46, %v208
  %210 = vmatmul.bf16.gmra.mxu0 %v146
  %v211 = vpop.f32.mrf.mxu0
  %v212 = vadd.f32 %v46, %v211
  %v213 = vpop.f32.mrf.mxu0
  %v214 = vadd.f32 %v46, %v213
  %215 = vmatmul.bf16.gmra.mxu0 %v149
  %v216 = vpop.f32.mrf.mxu0
  %v217 = vadd.f32 %v46, %v216
  %v218 = vpop.f32.mrf.mxu0
  %v219 = vadd.f32 %v46, %v218
  %220 = vmatmul.bf16.gmra.mxu0 %v152
  %v221 = vpop.f32.mrf.mxu0
  %v222 = vadd.f32 %v46, %v221
  %v223 = vpop.f32.mrf.mxu0
  %v224 = vadd.f32 %v46, %v223
  %225 = vmatmul.bf16.gmra.mxu0 %v155
  %v226 = vpop.f32.mrf.mxu0
  %v227 = vadd.f32 %v46, %v226
  %v228 = vpop.f32.mrf.mxu0
  %229 = vdwg.mxu0
  %v230 = vpack.c.bf16 %v167, %v167
  %v231 = vpack.c.bf16 %v169, %v169
  %v232 = vpack.c.bf16 %v172, %v172
  %v233 = vpack.c.bf16 %v174, %v174
  %v234 = vpack.c.bf16 %v177, %v177
  %v235 = vpack.c.bf16 %v179, %v179
  %v236 = vpack.c.bf16 %v182, %v182
  %v237 = vpack.c.bf16 %v184, %v184
  %v238 = vpack.c.bf16 %v187, %v187
  %v239 = vpack.c.bf16 %v189, %v189
  %v240 = vpack.c.bf16 %v192, %v192
  %v241 = vpack.c.bf16 %v194, %v194
  %v242 = vpack.c.bf16 %v197, %v197
  %v243 = vpack.c.bf16 %v199, %v199
  %v244 = vpack.c.bf16 %v202, %v202
  %v245 = vpack.c.bf16 %v204, %v204
  %v246 = vpack.c.bf16 %v207, %v207
  %v247 = vpack.c.bf16 %v209, %v209
  %v248 = vpack.c.bf16 %v212, %v212
  %v249 = vpack.c.bf16 %v214, %v214
  %v250 = vpack.c.bf16 %v217, %v217
  %v251 = vpack.c.bf16 %v219, %v219
  %v252 = vpack.c.bf16 %v222, %v222
  %v253 = vpack.c.bf16 %v224, %v224
  %v254 = vpack.c.bf16 %v227, %v227
  %255 = vst [vmem:[%s3] sm:$0xf] %v230
  %256 = vst [vmem:[%s3 + $0x4] sm:$0xf] %v231
  %257 = vst [vmem:[%s3 + $0x8] sm:$0xf] %v232
  %258 = vst [vmem:[%s3 + $0xc] sm:$0xf] %v233
  %259 = vst [vmem:[%s3 + $0x10] sm:$0xf] %v234
  %260 = vst [vmem:[%s3 + $0x14] sm:$0xf] %v235
  %261 = vst [vmem:[%s3 + $0x18] sm:$0xf] %v236
  %262 = vst [vmem:[%s3 + $0x1c] sm:$0xf] %v237
  %263 = vst [vmem:[%s3 + $0x20] sm:$0xf] %v238
  %264 = vst [vmem:[%s3 + $0x24] sm:$0xf] %v239
  %265 = vst [vmem:[%s3 + $0x28] sm:$0xf] %v240
  %266 = vst [vmem:[%s3 + $0x2c] sm:$0xf] %v241
  %267 = vst [vmem:[%s3 + $0x30] sm:$0xf] %v242
  %268 = vst [vmem:[%s3 + $0x34] sm:$0xf] %v243
  %269 = vst [vmem:[%s3 + $0x38] sm:$0xf] %v244
  %270 = vst [vmem:[%s3 + $0x3c] sm:$0xf] %v245
  %271 = vst [vmem:[%s3 + $0x40] sm:$0xf] %v246
  %272 = vst [vmem:[%s3 + $0x44] sm:$0xf] %v247
  %273 = vst [vmem:[%s3 + $0x48] sm:$0xf] %v248
  %274 = vst [vmem:[%s3 + $0x4c] sm:$0xf] %v249
  %275 = vst [vmem:[%s3 + $0x50] sm:$0xf] %v250
  %276 = vst [vmem:[%s3 + $0x54] sm:$0xf] %v251
  %277 = vst [vmem:[%s3 + $0x58] sm:$0xf] %v252
  %278 = vst [vmem:[%s3 + $0x5c] sm:$0xf] %v253
  %279 = vst [vmem:[%s3 + $0x60] sm:$0xf] %v254
  %s280 = smul.u32 0, 200
  %v281 = vlaneseq
  %v282 = vshrl.u32 %v281, 7
  %v283 = vadd.s32 %v282, 8
  %v284 = vadd.s32 %v282, 16
  %v285 = vadd.s32 %v282, 24
  %v286 = vadd.s32 %v282, 32
  %v287 = vadd.s32 %v282, 40
  %v288 = vadd.s32 %v282, 48
  %v289 = vadd.s32 %v282, 56
  %v290 = vadd.s32 %v282, 64
  %v291 = vadd.s32 %v282, 72
  %v292 = vadd.s32 %v282, 80
  %v293 = vadd.s32 %v282, 88
  %v294 = vadd.s32 %v282, 96
  %v295 = vadd.s32 %v282, 104
  %v296 = vadd.s32 %v282, 112
  %v297 = vadd.s32 %v282, 120
  %v298 = vadd.s32 %v282, 128
  %v299 = vadd.s32 %v282, 136
  %v300 = vadd.s32 %v282, 144
  %v301 = vadd.s32 %v282, 152
  %v302 = vadd.s32 %v282, 160
  %v303 = vadd.s32 %v282, 168
  %v304 = vadd.s32 %v282, 176
  %v305 = vadd.s32 %v282, 184
  %v306 = vadd.s32 %v282, 192
  %v307 = vstv %s280
  %v308 = vadd.s32 %v282, %v307
  %v309 = vadd.s32 %v283, %v307
  %v310 = vadd.s32 %v284, %v307
  %v311 = vadd.s32 %v285, %v307
  %v312 = vadd.s32 %v286, %v307
  %v313 = vadd.s32 %v287, %v307
  %v314 = vadd.s32 %v288, %v307
  %v315 = vadd.s32 %v289, %v307
  %v316 = vadd.s32 %v290, %v307
  %v317 = vadd.s32 %v291, %v307
  %v318 = vadd.s32 %v292, %v307
  %v319 = vadd.s32 %v293, %v307
  %v320 = vadd.s32 %v294, %v307
  %v321 = vadd.s32 %v295, %v307
  %v322 = vadd.s32 %v296, %v307
  %v323 = vadd.s32 %v297, %v307
  %v324 = vadd.s32 %v298, %v307
  %v325 = vadd.s32 %v299, %v307
  %v326 = vadd.s32 %v300, %v307
  %v327 = vadd.s32 %v301, %v307
  %v328 = vadd.s32 %v302, %v307
  %v329 = vadd.s32 %v303, %v307
  %v330 = vadd.s32 %v304, %v307
  %v331 = vadd.s32 %v305, %v307
  %v332 = vadd.s32 %v306, %v307
  %vm333 = vcmp.lt.s32.totalorder %v308, 200
  %vm334 = vcmp.lt.s32.totalorder %v309, 200
  %vm335 = vcmp.lt.s32.totalorder %v310, 200
  %vm336 = vcmp.lt.s32.totalorder %v311, 200
  %vm337 = vcmp.lt.s32.totalorder %v312, 200
  %vm338 = vcmp.lt.s32.totalorder %v313, 200
  %vm339 = vcmp.lt.s32.totalorder %v314, 200
  %vm340 = vcmp.lt.s32.totalorder %v315, 200
  %vm341 = vcmp.lt.s32.totalorder %v316, 200
  %vm342 = vcmp.lt.s32.totalorder %v317, 200
  %vm343 = vcmp.lt.s32.totalorder %v318, 200
  %vm344 = vcmp.lt.s32.totalorder %v319, 200
  %vm345 = vcmp.lt.s32.totalorder %v320, 200
  %vm346 = vcmp.lt.s32.totalorder %v321, 200
  %vm347 = vcmp.lt.s32.totalorder %v322, 200
  %vm348 = vcmp.lt.s32.totalorder %v323, 200
  %vm349 = vcmp.lt.s32.totalorder %v324, 200
  %vm350 = vcmp.lt.s32.totalorder %v325, 200
  %vm351 = vcmp.lt.s32.totalorder %v326, 200
  %vm352 = vcmp.lt.s32.totalorder %v327, 200
  %vm353 = vcmp.lt.s32.totalorder %v328, 200
  %vm354 = vcmp.lt.s32.totalorder %v329, 200
  %vm355 = vcmp.lt.s32.totalorder %v330, 200
  %vm356 = vcmp.lt.s32.totalorder %v331, 200
  %vm357 = vcmp.lt.s32.totalorder %v332, 200
  %v358 = vsel %vm333, 1, 0
  %v359 = vsel %vm334, 1, 0
  %v360 = vsel %vm335, 1, 0
  %v361 = vsel %vm336, 1, 0
  %v362 = vsel %vm337, 1, 0
  %v363 = vsel %vm338, 1, 0
  %v364 = vsel %vm339, 1, 0
  %v365 = vsel %vm340, 1, 0
  %v366 = vsel %vm341, 1, 0
  %v367 = vsel %vm342, 1, 0
  %v368 = vsel %vm343, 1, 0
  %v369 = vsel %vm344, 1, 0
  %v370 = vsel %vm345, 1, 0
  %v371 = vsel %vm346, 1, 0
  %v372 = vsel %vm347, 1, 0
  %v373 = vsel %vm348, 1, 0
  %v374 = vsel %vm349, 1, 0
  %v375 = vsel %vm350, 1, 0
  %v376 = vsel %vm351, 1, 0
  %v377 = vsel %vm352, 1, 0
  %v378 = vsel %vm353, 1, 0
  %v379 = vsel %vm354, 1, 0
  %v380 = vsel %vm355, 1, 0
  %v381 = vsel %vm356, 1, 0
  %v382 = vsel %vm357, 1, 0
  %v383 = vcvt.s32.f32 %v358
  %v384 = vcvt.s32.f32 %v359
  %v385 = vcvt.s32.f32 %v360
  %v386 = vcvt.s32.f32 %v361
  %v387 = vcvt.s32.f32 %v362
  %v388 = vcvt.s32.f32 %v363
  %v389 = vcvt.s32.f32 %v364
  %v390 = vcvt.s32.f32 %v365
  %v391 = vcvt.s32.f32 %v366
  %v392 = vcvt.s32.f32 %v367
  %v393 = vcvt.s32.f32 %v368
  %v394 = vcvt.s32.f32 %v369
  %v395 = vcvt.s32.f32 %v370
  %v396 = vcvt.s32.f32 %v371
  %v397 = vcvt.s32.f32 %v372
  %v398 = vcvt.s32.f32 %v373
  %v399 = vcvt.s32.f32 %v374
  %v400 = vcvt.s32.f32 %v375
  %v401 = vcvt.s32.f32 %v376
  %v402 = vcvt.s32.f32 %v377
  %v403 = vcvt.s32.f32 %v378
  %v404 = vcvt.s32.f32 %v379
  %v405 = vcvt.s32.f32 %v380
  %v406 = vcvt.s32.f32 %v381
  %v407 = vcvt.s32.f32 %v382
  %v408 = vmul.f32 %v167, %v383
  %v409 = vmul.f32 %v169, %v384
  %v410 = vmul.f32 %v172, %v385
  %v411 = vmul.f32 %v174, %v386
  %v412 = vmul.f32 %v177, %v387
  %v413 = vmul.f32 %v179, %v388
  %v414 = vmul.f32 %v182, %v389
  %v415 = vmul.f32 %v184, %v390
  %v416 = vmul.f32 %v187, %v391
  %v417 = vmul.f32 %v189, %v392
  %v418 = vmul.f32 %v192, %v393
  %v419 = vmul.f32 %v194, %v394
  %v420 = vmul.f32 %v197, %v395
  %v421 = vmul.f32 %v199, %v396
  %v422 = vmul.f32 %v202, %v397
  %v423 = vmul.f32 %v204, %v398
  %v424 = vmul.f32 %v207, %v399
  %v425 = vmul.f32 %v209, %v400
  %v426 = vmul.f32 %v212, %v401
  %v427 = vmul.f32 %v214, %v402
  %v428 = vmul.f32 %v217, %v403
  %v429 = vmul.f32 %v219, %v404
  %v430 = vmul.f32 %v222, %v405
  %v431 = vmul.f32 %v224, %v406
  %v432 = vmul.f32 %v227, %v407
  %v433 = vadd.f32 %v408, %v409
  %v434 = vadd.f32 %v433, %v410
  %v435 = vadd.f32 %v434, %v411
  %v436 = vadd.f32 %v435, %v412
  %v437 = vadd.f32 %v436, %v413
  %v438 = vadd.f32 %v437, %v414
  %v439 = vadd.f32 %v438, %v415
  %v440 = vadd.f32 %v439, %v416
  %v441 = vadd.f32 %v440, %v417
  %v442 = vadd.f32 %v441, %v418
  %v443 = vadd.f32 %v442, %v419
  %v444 = vadd.f32 %v443, %v420
  %v445 = vadd.f32 %v444, %v421
  %v446 = vadd.f32 %v445, %v422
  %v447 = vadd.f32 %v446, %v423
  %v448 = vadd.f32 %v447, %v424
  %v449 = vadd.f32 %v448, %v425
  %v450 = vadd.f32 %v449, %v426
  %v451 = vadd.f32 %v450, %v427
  %v452 = vadd.f32 %v451, %v428
  %v453 = vadd.f32 %v452, %v429
  %v454 = vadd.f32 %v453, %v430
  %v455 = vadd.f32 %v454, %v431
  %v456 = vadd.f32 %v455, %v432
  %v457 = vrot.slane %v456, 4
  %v458 = vadd.f32 %v456, %v457
  %v459 = vrot.slane %v458, 2
  %v460 = vadd.f32 %v458, %v459
  %v461 = vrot.slane %v460, 1
  %v462 = vadd.f32 %v460, %v461
  %v463 = vmul.f32 %v408, %v167
  %v464 = vmul.f32 %v409, %v169
  %v465 = vmul.f32 %v410, %v172
  %v466 = vmul.f32 %v411, %v174
  %v467 = vmul.f32 %v412, %v177
  %v468 = vmul.f32 %v413, %v179
  %v469 = vmul.f32 %v414, %v182
  %v470 = vmul.f32 %v415, %v184
  %v471 = vmul.f32 %v416, %v187
  %v472 = vmul.f32 %v417, %v189
  %v473 = vmul.f32 %v418, %v192
  %v474 = vmul.f32 %v419, %v194
  %v475 = vmul.f32 %v420, %v197
  %v476 = vmul.f32 %v421, %v199
  %v477 = vmul.f32 %v422, %v202
  %v478 = vmul.f32 %v423, %v204
  %v479 = vmul.f32 %v424, %v207
  %v480 = vmul.f32 %v425, %v209
  %v481 = vmul.f32 %v426, %v212
  %v482 = vmul.f32 %v427, %v214
  %v483 = vmul.f32 %v428, %v217
  %v484 = vmul.f32 %v429, %v219
  %v485 = vmul.f32 %v430, %v222
  %v486 = vmul.f32 %v431, %v224
  %v487 = vmul.f32 %v432, %v227
  %v488 = vadd.f32 %v463, %v464
  %v489 = vadd.f32 %v488, %v465
  %v490 = vadd.f32 %v489, %v466
  %v491 = vadd.f32 %v490, %v467
  %v492 = vadd.f32 %v491, %v468
  %v493 = vadd.f32 %v492, %v469
  %v494 = vadd.f32 %v493, %v470
  %v495 = vadd.f32 %v494, %v471
  %v496 = vadd.f32 %v495, %v472
  %v497 = vadd.f32 %v496, %v473
  %v498 = vadd.f32 %v497, %v474
  %v499 = vadd.f32 %v498, %v475
  %v500 = vadd.f32 %v499, %v476
  %v501 = vadd.f32 %v500, %v477
  %v502 = vadd.f32 %v501, %v478
  %v503 = vadd.f32 %v502, %v479
  %v504 = vadd.f32 %v503, %v480
  %v505 = vadd.f32 %v504, %v481
  %v506 = vadd.f32 %v505, %v482
  %v507 = vadd.f32 %v506, %v483
  %v508 = vadd.f32 %v507, %v484
  %v509 = vadd.f32 %v508, %v485
  %v510 = vadd.f32 %v509, %v486
  %v511 = vadd.f32 %v510, %v487
  %v512 = vrot.slane %v511, 4
  %v513 = vadd.f32 %v511, %v512
  %v514 = vrot.slane %v513, 2
  %v515 = vadd.f32 %v513, %v514
  %v516 = vrot.slane %v515, 1
  %v517 = vadd.f32 %v515, %v516
  %vm518 = vcmp.eq.s32.totalorder %v282, 0
  %vm519 = vcmp.eq.s32.totalorder %v282, 1
  %v520 = vsel %vm519, %v517, 0.0
  %v521 = vsel %vm518, %v462, %v520
  %522 = vst [vmem:[%s4] sm:$0xff] %v521
  // Predicated region
  $region14: #{mlp_forward.2} parent=0 // pred_check
    _
  $region15: #{mlp_forward.2} parent=0 // pred_check_branch
    %524 = sbr.rel (0) target = $region17
  $region16: #{mlp_forward.2} parent=0 // pred_region
    _
  $region17: #{mlp_forward.2} parent=0 // pred_fallthru
    _
  // Predicated region
  $region18: #{mlp_forward.2} parent=0 // pred_check
    _
  $region19: #{mlp_forward.2} parent=0 // pred_check_branch
    %526 = sbr.rel (0) target = $region21
  $region20: #{mlp_forward.2} parent=0 // pred_region
    _
  $region21: #{mlp_forward.2} parent=0 // pred_fallthru
    _
  // Predicated region
  $region22: #{mlp_forward.2} parent=0 // pred_check
    _
  $region23: #{mlp_forward.2} parent=0 // pred_check_branch
    %528 = sbr.rel (0) target = $region25
  $region24: #{mlp_forward.2} parent=0 // pred_region
    _
  $region25: #{mlp_forward.2} parent=0 // pred_fallthru
    _
  // Predicated region
  $region26: #{mlp_forward.2} parent=0 // pred_check
    _
  $region27: #{mlp_forward.2} parent=0 // pred_check_branch
    %530 = sbr.rel (0) target = $region29
  $region28: #{mlp_forward.2} parent=0 // pred_region
    _
  $region29: #{mlp_forward.2} parent=0 // pred_fallthru
    _

</llo_original>
